<compile_context>
chip_gen: v7x
topology: tpu7x:2x2x1
jax: 0.10.0
libtpu: 0.0.40
codegen_flags: <defaults>
</compile_context>

<pallas_src>
import math
from functools import partial

import jax
import jax.numpy as jnp
from jax import lax
from jax.experimental import pallas as pl
from jax.experimental.pallas import tpu as pltpu

_LANE = 128
_SUBLANE = 8
_ACC_ROWS_MAX = 64                      # 8 independent (8,128) accumulator vregs
_TARGET_BLOCK_BYTES = 4 * 1024 * 1024   # ~4 MiB/step: good on v5e/v6e, safe on v7x
_VMEM_LIMIT_BYTES = 32 * 1024 * 1024


def _cdiv(a, b):
    return -(-a // b)


def _sumsq_kernel(z_ref, out_ref, *, acc_rows, unroll):
    """Stream a (tr, 128) native-dtype tile; write (acc_rows, 128) f32 partials."""
    tr = z_ref.shape[0]
    nchunks = tr // acc_rows

    def body(i, acc):
        off = pl.multiple_of(i * acc_rows, acc_rows)
        x = z_ref[pl.ds(off, acc_rows), :].astype(jnp.float32)
        return acc + x * x              # acc_rows/8 parallel vreg-add chains

    acc0 = jnp.zeros((acc_rows, _LANE), jnp.float32)
    out_ref[...] = lax.fori_loop(0, nchunks, body, acc0, unroll=unroll)


def _partial_sumsq(z2d, nb, tr, acc_rows, n_main, itemsize):
    """Per-row-tile partial sums of z^2, shape (nb*acc_rows, 128) float32."""
    kernel = partial(
        _sumsq_kernel,
        acc_rows=acc_rows,
        unroll=min(4, max(1, tr // acc_rows)),
    )
    if nb >= 3:
        in_spec = pl.BlockSpec((tr, _LANE), lambda p: (p, 0),
                               pipeline_mode=pl.Buffered(3))
    else:
        in_spec = pl.BlockSpec((tr, _LANE), lambda p: (p, 0))
    return pl.pallas_call(
        kernel,
        out_shape=jax.ShapeDtypeStruct((nb * acc_rows, _LANE), jnp.float32),
        grid_spec=pltpu.PrefetchScalarGridSpec(
            num_scalar_prefetch=0,
            grid=(nb,),
            in_specs=[in_spec],
            out_specs=pl.BlockSpec((acc_rows, _LANE), lambda p: (p, 0)),
        ),
        compiler_params=pltpu.CompilerParams(
            dimension_semantics=("parallel",),
            vmem_limit_bytes=_VMEM_LIMIT_BYTES,
        ),
        cost_estimate=pl.CostEstimate(
            flops=2 * n_main,
            transcendentals=0,
            bytes_accessed=n_main * itemsize + nb * acc_rows * _LANE * 4,
        ),
    )(z2d)


def flow_loss(z, sldj):
    """Returns (nll, prior_ll_mean, sldj_mean) as float32 scalars."""
    # TODO(synk): the class-conditional branch (prior.log_prob(z, y)) has no
    # concrete prior in the reference module and is not modeled here.
    b = z.shape[0]
    d = 1
    for s in z.shape[1:]:
        d *= s
    n = b * d
    itemsize = jnp.dtype(z.dtype).itemsize

    # Lane-dense (rows, 128) view of z in its native dtype.
    if n % _LANE == 0:
        rows = n // _LANE
        z2d = z.reshape(rows, _LANE)      # contiguous reshape: bitcast, no HBM copy
    else:
        # TODO(synk): sub-128-element misalignment still needs one flat pad copy.
        rows = _cdiv(n, _LANE)
        flat = jnp.pad(z.reshape(-1), (0, rows * _LANE - n))
        z2d = flat.reshape(rows, _LANE)

    # Row-tile: ~_TARGET_BLOCK_BYTES per grid step, multiple of 8 sublanes.
    tr_target = max(
        _SUBLANE,
        (_TARGET_BLOCK_BYTES // (_LANE * itemsize)) // _SUBLANE * _SUBLANE,
    )
    tr = min(tr_target, (rows // _SUBLANE) * _SUBLANE)

    total_sq = jnp.float32(0.0)
    main_rows = 0
    if tr >= _SUBLANE:
        nb = rows // tr                       # full tiles only -> no in-kernel mask
        acc_rows = math.gcd(tr, _ACC_ROWS_MAX)
        main_rows = nb * tr
        partials = _partial_sumsq(z2d, nb, tr, acc_rows,
                                  main_rows * _LANE, itemsize)
        total_sq = total_sq + jnp.sum(partials)
    if main_rows < rows:
        # <1-tile row remainder: tiny jnp reduction instead of padding/masking.
        tail = z2d[main_rows:, :].astype(jnp.float32)
        total_sq = total_sq + jnp.sum(tail * tail)

    # Finalize on scalars (+ the B-element sldj vector).
    bf = jnp.float32(b)
    log_2pi = math.log(2.0 * math.pi)
    prior_ll_mean = -0.5 * total_sq / bf - jnp.float32(0.5 * d * log_2pi)
    sldj_mean = jnp.mean(sldj.astype(jnp.float32))
    nll = -(prior_ll_mean + sldj_mean)
    return nll, prior_ll_mean, sldj_mean


def _flow_loss_ref(z, sldj):
    b = z.shape[0]
    zf = z.reshape(b, -1).astype(jnp.float32)
    d = zf.shape[1]
    prior_ll = -0.5 * jnp.sum(zf * zf, axis=1) - 0.5 * d * math.log(2.0 * math.pi)
    ll = prior_ll + sldj.astype(jnp.float32)
    return -jnp.mean(ll), jnp.mean(prior_ll), jnp.mean(sldj.astype(jnp.float32))


if __name__ == "__main__":
    key = jax.random.PRNGKey(0)
    kz, ks = jax.random.split(key)
    # z as produced by a flow: (B, C, H, W); sldj: (B,)
    z = jax.random.normal(kz, (2, 4, 16, 16), dtype=jnp.float32)
    sldj = jax.random.normal(ks, (2,), dtype=jnp.float32) * 10.0

    out = jax.jit(flow_loss)(z, sldj)
    out = jax.block_until_ready(out)

    ref = _flow_loss_ref(z, sldj)
    for got, want in zip(out, ref):
        if not jnp.allclose(got, want, rtol=1e-5, atol=1e-4):
            raise AssertionError(f"mismatch: got {got}, want {want}")

    print("KERNEL_OK")
</pallas_src>

<mosaic_0001>
module attributes {stable_mosaic.version = 11 : i64} {
  func.func @_sumsq_kernel(%arg0: i32, %arg1: memref<16x128xf32, #tpu.memory_space<vmem>>, %arg2: memref<16x128xf32, #tpu.memory_space<vmem>>) attributes {dimension_semantics = [#tpu.dimension_semantics<parallel>], iteration_bounds = array<i64: 1>, scalar_prefetch = 0 : i64, scratch_operands = 0 : i64, tpu.core_type = #tpu.core_type<tc>, window_params = [{transform_indices = @transform_0, window_bounds = array<i64: 16, 128>}, {transform_indices = @transform_1, window_bounds = array<i64: 16, 128>}]} {
    %cst = arith.constant 0.000000e+00 : f32
    %0 = vector.broadcast %cst : f32 to vector<16x128xf32>
    %c0_i32 = arith.constant 0 : i32
    %c16_i32 = arith.constant 16 : i32
    %1 = arith.muli %c0_i32, %c16_i32 : i32
    %2 = tpu.assume_multiple %1, 16 : i32
    %3 = arith.index_cast %2 : i32 to index
    %c0 = arith.constant 0 : index
    %4 = vector.load %arg1[%3, %c0] : memref<16x128xf32, #tpu.memory_space<vmem>>, vector<16x128xf32>
    %5 = arith.mulf %4, %4 : vector<16x128xf32>
    %6 = arith.addf %0, %5 : vector<16x128xf32>
    %c1_i32 = arith.constant 1 : i32
    %c0_0 = arith.constant 0 : index
    %c0_1 = arith.constant 0 : index
    %7 = vector.load %arg2[%c0_0, %c0_1] : memref<16x128xf32, #tpu.memory_space<vmem>>, vector<16x128xf32>
    tpu.vector_store %arg2[%c0_0, %c0_1], %6 {strides = array<i32>} : memref<16x128xf32, #tpu.memory_space<vmem>>, vector<16x128xf32>,
    return
  }
  func.func @transform_0(%arg0: i32) -> (i32, i32) {
    %c0_i32 = arith.constant 0 : i32
    %c0_i32_0 = arith.constant 0 : i32
    return %arg0, %c0_i32 : i32, i32
  }
  func.func @transform_1(%arg0: i32) -> (i32, i32) {
    %c0_i32 = arith.constant 0 : i32
    %c0_i32_0 = arith.constant 0 : i32
    return %arg0, %c0_i32 : i32, i32
  }
}

</mosaic_0001>

<llo_original>
// kernel: flow_loss.1
$region0: #{flow_loss.1}
  #allocation0 [shape = 'u32[]', space=smem, size = 0x4, offset = 0x4, fixed_abs, tag = 'smem constant byte address 0x4 - core index']
  #allocation1 [shape = 'u32[144,128]{1,0:T(1,128)}', space=vmem, size = 0x12000, scoped, tag = 'internal scratch']
  %s0 = inlined_call_operand.vmem [shape: f32[16,128], index: 0, kind: input, shape index: {}]
  %s1 = inlined_call_operand.vmem [shape: f32[16,128], index: 1, kind: output, shape index: {}]
  %s2 = sld [smem:[#allocation0]]
  $region14: #{flow_loss.1} parent=0
    _
  %s4 = ssub.s32 1, %s2
  %s5 = scalar_select 0, %s4, %s2
  // Predicated region
  $region2: #{flow_loss.1} parent=0 // pred_check
    _
  $region3: #{flow_loss.1} parent=0 // pred_check_branch
    %7 = sbr.rel (0) target = $region5
  $region4: #{flow_loss.1} parent=0 // pred_region
    _
  $region5: #{flow_loss.1} parent=0 // pred_fallthru
    _
  %v8 = vld [vmem:[%s0] sm:$0xff]
  %v9 = vld [vmem:[%s0 + $0x8] sm:$0xff]
  %v10 = vmul.f32 %v8, %v8
  %v11 = vmul.f32 %v9, %v9
  %v12 = vadd.f32 %v10, 0.0
  %v13 = vadd.f32 %v11, 0.0
  %14 = vst [vmem:[%s1] sm:$0xff] %v12
  %15 = vst [vmem:[%s1 + $0x8] sm:$0xff] %v13
  // Predicated region
  $region6: #{flow_loss.1} parent=0 // pred_check
    _
  $region7: #{flow_loss.1} parent=0 // pred_check_branch
    %17 = sbr.rel (0) target = $region9
  $region8: #{flow_loss.1} parent=0 // pred_region
    _
  $region9: #{flow_loss.1} parent=0 // pred_fallthru
    _
  // Predicated region
  $region10: #{flow_loss.1} parent=0 // pred_check
    _
  $region11: #{flow_loss.1} parent=0 // pred_check_branch
    %19 = sbr.rel (0) target = $region13
  $region12: #{flow_loss.1} parent=0 // pred_region
    _
  $region13: #{flow_loss.1} parent=0 // pred_fallthru
    _

</llo_original>
